<compile_context>
chip_gen: v5e
topology: v5e:2x2
jax: 0.10.0
libtpu: 0.0.40
codegen_flags: <defaults>
</compile_context>

<pallas_src>
import functools

import jax
import jax.numpy as jnp
from jax.experimental import pallas as pl
from jax.experimental.pallas import tpu as pltpu


_VMEM_LIMIT_BYTES = 48 * 1024 * 1024      # < v7x 64 MiB physical; fine on v5e/v6e
_FUSED_RESIDENCY_CAP = 40 * 1024 * 1024   # in/out double-buffered + f32 temps
_DEFAULT_TILE_BYTES = 4 * 1024 * 1024     # two-pass spatial tile target


# ---------------------------------------------------------------------------
# Fused single-pass kernel: stats + coefficient folding + apply, per batch.
# ---------------------------------------------------------------------------
def _fused_kernel(x_ref, g_ref, b_ref, rho_ref, out_ref, *, eps, n_hw, n_ch):
    x = x_ref[...].astype(jnp.float32)                    # (1, C, HWp)

    s = jnp.sum(x, axis=2, keepdims=True)                 # (1, C, 1)
    sq = jnp.sum(x * x, axis=2, keepdims=True)            # (1, C, 1)

    # Instance-norm stats (torch.var default: unbiased, ddof=1).  Padded
    # zeros contribute nothing to s/sq; n_hw is the *real* H*W.
    in_mean = s / n_hw
    in_var = jnp.maximum((sq - n_hw * in_mean * in_mean) / (n_hw - 1.0), 0.0)
    in_rstd = jax.lax.rsqrt(in_var + eps)

    # Layer-norm stats derived from the per-channel partial sums (no second
    # full-slab reduction).
    n_ln = n_ch * n_hw
    s_all = jnp.sum(s, axis=1, keepdims=True)              # (1, 1, 1)
    sq_all = jnp.sum(sq, axis=1, keepdims=True)
    ln_mean = s_all / n_ln
    ln_var = jnp.maximum((sq_all - n_ln * ln_mean * ln_mean) / (n_ln - 1.0), 0.0)
    ln_rstd = jax.lax.rsqrt(ln_var + eps)

    rho = rho_ref[...].astype(jnp.float32)                 # (1, C, 1)
    g = g_ref[...].astype(jnp.float32)
    bt = b_ref[...].astype(jnp.float32)

    mix_rstd = rho * in_rstd + (1.0 - rho) * ln_rstd
    mix_mean_rstd = rho * in_mean * in_rstd + (1.0 - rho) * ln_mean * ln_rstd
    a_coef = g * mix_rstd                                   # per-channel scale
    b_coef = bt - g * mix_mean_rstd                         # per-channel shift

    out_ref[...] = (x * a_coef + b_coef).astype(out_ref.dtype)


# ---------------------------------------------------------------------------
# Two-pass fallback kernels (slab does not fit VMEM).
# ---------------------------------------------------------------------------
def _stats_kernel(x_ref, sum_ref, sumsq_ref):
    """Accumulate per-channel sum / sum-of-squares over spatial tiles.

    x_ref:     (1, C, HW_TILE)  current (batch, split, spatial-tile) slab
    sum_ref:   (1, C, 1)        resident accumulator (same block across tiles)
    sumsq_ref: (1, C, 1)        resident accumulator
    """
    t = pl.program_id(2)

    @pl.when(t == 0)
    def _():
        sum_ref[...] = jnp.zeros_like(sum_ref)
        sumsq_ref[...] = jnp.zeros_like(sumsq_ref)

    x = x_ref[...].astype(jnp.float32)              # tile-sized f32 temp only
    sum_ref[...] += jnp.sum(x, axis=2, keepdims=True)
    sumsq_ref[...] += jnp.sum(x * x, axis=2, keepdims=True)


def _apply_kernel(x_ref, a_ref, b_ref, out_ref):
    """out = x * A_c + B_c  (per-channel fused scale/shift)."""
    x = x_ref[...].astype(jnp.float32)              # (1, C, HW_TILE)
    out_ref[...] = (x * a_ref[...] + b_ref[...]).astype(out_ref.dtype)


# ---------------------------------------------------------------------------
# Helpers
# ---------------------------------------------------------------------------
def _choose_hw_tile(hwp, c, dtype_bytes, max_tile_bytes):
    """Largest multiple-of-128 spatial tile dividing hwp with a (C, tile)
    block around max_tile_bytes.  hwp is always a multiple of 128 here."""
    max_lanes = max(128, (max_tile_bytes // max(1, dtype_bytes * c)) // 128 * 128)
    t = min(hwp, max_lanes)
    t = (t // 128) * 128
    while t > 128:
        if hwp % t == 0:
            return t
        t -= 128
    return 128


def _adailn_two_pass(x2, g3, b3, rho3, eps, hw, max_tile_bytes):
    """Fallback: pass 1 per-channel sum/sumsq, tiny JAX epilogue folding
    IN/LN stats + gamma/beta/rho into per-channel A/B, pass 2 one FMA/elem."""
    B, C, hwp = x2.shape
    hw_tile = _choose_hw_tile(hwp, C, x2.dtype.itemsize, max_tile_bytes)
    n_tiles = hwp // hw_tile

    # Split the stats reduction spatially so both v7x TensorCores stream HBM
    # even when B == 1 (only "parallel" grid axes shard across cores).
    n_split = 2 if (n_tiles % 2 == 0 and n_tiles >= 2) else 1
    tiles_per_split = n_tiles // n_split

    stats_sum, stats_sq = pl.pallas_call(
        _stats_kernel,
        out_shape=(
            jax.ShapeDtypeStruct((B * n_split, C, 1), jnp.float32),
            jax.ShapeDtypeStruct((B * n_split, C, 1), jnp.float32),
        ),
        grid_spec=pltpu.PrefetchScalarGridSpec(
            num_scalar_prefetch=0,
            grid=(B, n_split, tiles_per_split),
            in_specs=[pl.BlockSpec(
                (1, C, hw_tile),
                lambda b, p, t: (b, 0, p * tiles_per_split + t))],
            out_specs=[
                pl.BlockSpec((1, C, 1), lambda b, p, t: (b * n_split + p, 0, 0)),
                pl.BlockSpec((1, C, 1), lambda b, p, t: (b * n_split + p, 0, 0)),
            ],
        ),
        compiler_params=pltpu.CompilerParams(
            dimension_semantics=("parallel", "parallel", "arbitrary"),
            vmem_limit_bytes=_VMEM_LIMIT_BYTES),
    )(x2)

    # ---- tiny per-(b, c) epilogue: fold everything into A_c, B_c ----------
    s = stats_sum.reshape(B, n_split, C).sum(axis=1)
    sq = stats_sq.reshape(B, n_split, C).sum(axis=1)

    n_in = float(hw)                                  # real element count
    in_mean = s / n_in
    in_var = jnp.maximum((sq - n_in * in_mean * in_mean) / (n_in - 1.0), 0.0)
    in_rstd = jax.lax.rsqrt(in_var + eps)

    n_ln = float(C * hw)
    ln_mean = jnp.sum(s, axis=1, keepdims=True) / n_ln
    ln_var = jnp.maximum(
        (jnp.sum(sq, axis=1, keepdims=True) - n_ln * ln_mean * ln_mean)
        / (n_ln - 1.0), 0.0)
    ln_rstd = jax.lax.rsqrt(ln_var + eps)

    rho2 = rho3.reshape(1, C).astype(jnp.float32)
    g = g3.reshape(B, C).astype(jnp.float32)
    bt = b3.reshape(B, C).astype(jnp.float32)

    mix_rstd = rho2 * in_rstd + (1.0 - rho2) * ln_rstd
    mix_mean_rstd = (rho2 * in_mean * in_rstd
                     + (1.0 - rho2) * ln_mean * ln_rstd)
    a_coef = (g * mix_rstd).reshape(B, C, 1)                 # per-channel scale
    b_coef = (bt - g * mix_mean_rstd).reshape(B, C, 1)       # per-channel shift

    # ---- pass 2: single FMA per element ------------------------------------
    return pl.pallas_call(
        _apply_kernel,
        out_shape=jax.ShapeDtypeStruct((B, C, hwp), x2.dtype),
        grid_spec=pltpu.PrefetchScalarGridSpec(
            num_scalar_prefetch=0,
            grid=(B, n_tiles),
            in_specs=[
                pl.BlockSpec((1, C, hw_tile), lambda b, t: (b, 0, t)),
                pl.BlockSpec((1, C, 1), lambda b, t: (b, 0, 0)),
                pl.BlockSpec((1, C, 1), lambda b, t: (b, 0, 0)),
            ],
            out_specs=pl.BlockSpec((1, C, hw_tile), lambda b, t: (b, 0, t)),
        ),
        compiler_params=pltpu.CompilerParams(
            dimension_semantics=("parallel", "parallel"),
            vmem_limit_bytes=_VMEM_LIMIT_BYTES),
    )(x2, a_coef, b_coef)


# ---------------------------------------------------------------------------
# Public wrapper
# ---------------------------------------------------------------------------
def adailn(x, gamma, beta, rho, eps=1e-5, *, force_two_pass=False,
           max_tile_bytes=_DEFAULT_TILE_BYTES):
    """x: (B, C, H, W); gamma, beta: (B, C); rho: (1, C, 1, 1)."""
    B, C, H, W = x.shape
    hw = H * W
    hwp = ((hw + 127) // 128) * 128                  # lane-dense padded extent
    x2 = x.reshape(B, C, hw)
    if hwp != hw:
        # Zero pad: contributes 0 to sum/sumsq; real hw used as denominator.
        x2 = jnp.pad(x2, ((0, 0), (0, 0), (0, hwp - hw)))

    g3 = gamma.reshape(B, C, 1)
    b3 = beta.reshape(B, C, 1)
    rho3 = rho.reshape(1, C, 1)

    # Fused-path gate: in + out double-buffered plus ~2 f32-slab temps must
    # fit comfortably under the explicit VMEM limit (holds on v7x too).
    slab_io = C * hwp * x.dtype.itemsize
    slab_f32 = C * hwp * 4
    resid_est = 4 * slab_io + 2 * slab_f32
    use_fused = (not force_two_pass) and resid_est <= _FUSED_RESIDENCY_CAP

    if use_fused:
        out2 = pl.pallas_call(
            functools.partial(_fused_kernel, eps=float(eps),
                              n_hw=float(hw), n_ch=float(C)),
            out_shape=jax.ShapeDtypeStruct((B, C, hwp), x.dtype),
            grid_spec=pltpu.PrefetchScalarGridSpec(
                num_scalar_prefetch=0,
                grid=(B,),
                in_specs=[
                    pl.BlockSpec((1, C, hwp), lambda b: (b, 0, 0)),
                    pl.BlockSpec((1, C, 1), lambda b: (b, 0, 0)),
                    pl.BlockSpec((1, C, 1), lambda b: (b, 0, 0)),
                    pl.BlockSpec((1, C, 1), lambda b: (0, 0, 0)),
                ],
                out_specs=pl.BlockSpec((1, C, hwp), lambda b: (b, 0, 0)),
            ),
            compiler_params=pltpu.CompilerParams(
                dimension_semantics=("parallel",),
                vmem_limit_bytes=_VMEM_LIMIT_BYTES),
        )(x2, g3, b3, rho3)
    else:
        out2 = _adailn_two_pass(x2, g3, b3, rho3, float(eps), hw, max_tile_bytes)

    if hwp != hw:
        out2 = out2[:, :, :hw]
    return out2.reshape(B, C, H, W)


# ---------------------------------------------------------------------------
# Pure-JAX reference (mirrors the PyTorch forward exactly)
# ---------------------------------------------------------------------------
def adailn_ref(x, gamma, beta, rho, eps=1e-5):
    x = x.astype(jnp.float32)
    in_mean = jnp.mean(x, axis=(2, 3), keepdims=True)
    in_var = jnp.var(x, axis=(2, 3), keepdims=True, ddof=1)
    out_in = (x - in_mean) / jnp.sqrt(in_var + eps)
    ln_mean = jnp.mean(x, axis=(1, 2, 3), keepdims=True)
    ln_var = jnp.var(x, axis=(1, 2, 3), keepdims=True, ddof=1)
    out_ln = (x - ln_mean) / jnp.sqrt(ln_var + eps)
    out = rho * out_in + (1.0 - rho) * out_ln
    out = out * gamma[:, :, None, None] + beta[:, :, None, None]
    return out


if __name__ == "__main__":
    key = jax.random.PRNGKey(0)

    def run_case(B, C, H, W, **kw):
        kx, kg, kb = jax.random.split(jax.random.fold_in(key, H * W * 131 + C), 3)
        x = jax.random.normal(kx, (B, C, H, W), dtype=jnp.float32)
        gamma = jax.random.normal(kg, (B, C), dtype=jnp.float32)
        beta = jax.random.normal(kb, (B, C), dtype=jnp.float32)
        # Parameter init matches PyTorch: rho.data.fill_(0.9), shape (1,C,1,1).
        rho = jnp.full((1, C, 1, 1), 0.9, dtype=jnp.float32)
        out = jax.block_until_ready(adailn(x, gamma, beta, rho, **kw))
        ref = adailn_ref(x, gamma, beta, rho)
        assert out.shape == (B, C, H, W)
        assert jnp.allclose(out, ref, atol=1e-4, rtol=1e-4), (
            f"mismatch vs reference for case {(B, C, H, W)} {kw}")

    # Primary fused single-pass path.
    run_case(2, 4, 16, 16)
    # Non-128-multiple spatial extent -> zero-padded, still fused.
    run_case(2, 4, 15, 15)
    # Two-pass fallback incl. split stats reduction (forced for coverage).
    run_case(2, 4, 16, 16, force_two_pass=True, max_tile_bytes=512)

    print("KERNEL_OK")
</pallas_src>

<mosaic_0001>
module attributes {stable_mosaic.version = 11 : i64} {
  func.func @_fused_kernel(%arg0: i32, %arg1: memref<1x4x256xf32, #tpu.memory_space<vmem>>, %arg2: memref<1x4x1xf32, #tpu.memory_space<vmem>>, %arg3: memref<1x4x1xf32, #tpu.memory_space<vmem>>, %arg4: memref<1x4x1xf32, #tpu.memory_space<vmem>>, %arg5: memref<1x4x256xf32, #tpu.memory_space<vmem>>) attributes {dimension_semantics = [#tpu.dimension_semantics<parallel>], iteration_bounds = array<i64: 2>, scalar_prefetch = 0 : i64, scratch_operands = 0 : i64, tpu.core_type = #tpu.core_type<tc>, window_params = [{transform_indices = @transform_0, window_bounds = array<i64: 1, 4, 256>}, {transform_indices = @transform_1, window_bounds = array<i64: 1, 4, 1>}, {transform_indices = @transform_2, window_bounds = array<i64: 1, 4, 1>}, {pipeline_mode = #tpu.pipeline_mode<synchronous>, transform_indices = @transform_3, window_bounds = array<i64: 1, 4, 1>}, {transform_indices = @transform_4, window_bounds = array<i64: 1, 4, 256>}]} {
    %c0 = arith.constant 0 : index
    %c0_0 = arith.constant 0 : index
    %c0_1 = arith.constant 0 : index
    %0 = vector.load %arg1[%c0, %c0_0, %c0_1] : memref<1x4x256xf32, #tpu.memory_space<vmem>>, vector<1x4x256xf32>
    %cst = arith.constant dense<0.000000e+00> : vector<1x4xf32>
    %1 = vector.multi_reduction <add>, %0, %cst [2] : vector<1x4x256xf32> to vector<1x4xf32>
    %2 = vector.shape_cast %1 : vector<1x4xf32> to vector<1x4x1xf32>
    %3 = arith.mulf %0, %0 : vector<1x4x256xf32>
    %cst_2 = arith.constant dense<0.000000e+00> : vector<1x4xf32>
    %4 = vector.multi_reduction <add>, %3, %cst_2 [2] : vector<1x4x256xf32> to vector<1x4xf32>
    %5 = vector.shape_cast %4 : vector<1x4xf32> to vector<1x4x1xf32>
    %cst_3 = arith.constant 2.560000e+02 : f32
    %6 = vector.broadcast %cst_3 : f32 to vector<1x4x1xf32>
    %7 = arith.divf %2, %6 : vector<1x4x1xf32>
    %cst_4 = arith.constant 2.560000e+02 : f32
    %8 = vector.broadcast %cst_4 : f32 to vector<1x4x1xf32>
    %9 = arith.mulf %8, %7 : vector<1x4x1xf32>
    %10 = arith.mulf %9, %7 : vector<1x4x1xf32>
    %11 = arith.subf %5, %10 : vector<1x4x1xf32>
    %cst_5 = arith.constant 2.550000e+02 : f32
    %12 = vector.broadcast %cst_5 : f32 to vector<1x4x1xf32>
    %13 = arith.divf %11, %12 : vector<1x4x1xf32>
    %cst_6 = arith.constant 0.000000e+00 : f32
    %14 = vector.broadcast %cst_6 : f32 to vector<1x4x1xf32>
    %15 = arith.maximumf %13, %14 : vector<1x4x1xf32>
    %cst_7 = arith.constant 9.99999974E-6 : f32
    %16 = vector.broadcast %cst_7 : f32 to vector<1x4x1xf32>
    %17 = arith.addf %15, %16 : vector<1x4x1xf32>
    %18 = math.rsqrt %17 : vector<1x4x1xf32>
    %cst_8 = arith.constant dense<0.000000e+00> : vector<1x1xf32>
    %19 = vector.multi_reduction <add>, %2, %cst_8 [1] : vector<1x4x1xf32> to vector<1x1xf32>
    %20 = vector.shape_cast %19 : vector<1x1xf32> to vector<1x1x1xf32>
    %cst_9 = arith.constant dense<0.000000e+00> : vector<1x1xf32>
    %21 = vector.multi_reduction <add>, %5, %cst_9 [1] : vector<1x4x1xf32> to vector<1x1xf32>
    %22 = vector.shape_cast %21 : vector<1x1xf32> to vector<1x1x1xf32>
    %cst_10 = arith.constant 1.024000e+03 : f32
    %23 = vector.broadcast %cst_10 : f32 to vector<1x1x1xf32>
    %24 = arith.divf %20, %23 : vector<1x1x1xf32>
    %cst_11 = arith.constant 1.024000e+03 : f32
    %25 = vector.broadcast %cst_11 : f32 to vector<1x1x1xf32>
    %26 = arith.mulf %25, %24 : vector<1x1x1xf32>
    %27 = arith.mulf %26, %24 : vector<1x1x1xf32>
    %28 = arith.subf %22, %27 : vector<1x1x1xf32>
    %cst_12 = arith.constant 1.023000e+03 : f32
    %29 = vector.broadcast %cst_12 : f32 to vector<1x1x1xf32>
    %30 = arith.divf %28, %29 : vector<1x1x1xf32>
    %cst_13 = arith.constant 0.000000e+00 : f32
    %31 = vector.broadcast %cst_13 : f32 to vector<1x1x1xf32>
    %32 = arith.maximumf %30, %31 : vector<1x1x1xf32>
    %cst_14 = arith.constant 9.99999974E-6 : f32
    %33 = vector.broadcast %cst_14 : f32 to vector<1x1x1xf32>
    %34 = arith.addf %32, %33 : vector<1x1x1xf32>
    %35 = math.rsqrt %34 : vector<1x1x1xf32>
    %c0_15 = arith.constant 0 : index
    %c0_16 = arith.constant 0 : index
    %c0_17 = arith.constant 0 : index
    %36 = vector.load %arg4[%c0_15, %c0_16, %c0_17] : memref<1x4x1xf32, #tpu.memory_space<vmem>>, vector<1x4x1xf32>
    %c0_18 = arith.constant 0 : index
    %c0_19 = arith.constant 0 : index
    %c0_20 = arith.constant 0 : index
    %37 = vector.load %arg2[%c0_18, %c0_19, %c0_20] : memref<1x4x1xf32, #tpu.memory_space<vmem>>, vector<1x4x1xf32>
    %c0_21 = arith.constant 0 : index
    %c0_22 = arith.constant 0 : index
    %c0_23 = arith.constant 0 : index
    %38 = vector.load %arg3[%c0_21, %c0_22, %c0_23] : memref<1x4x1xf32, #tpu.memory_space<vmem>>, vector<1x4x1xf32>
    %39 = arith.mulf %36, %18 : vector<1x4x1xf32>
    %cst_24 = arith.constant 1.000000e+00 : f32
    %40 = vector.broadcast %cst_24 : f32 to vector<1x4x1xf32>
    %41 = arith.subf %40, %36 : vector<1x4x1xf32>
    %42 = vector.broadcast %35 : vector<1x1x1xf32> to vector<1x4x1xf32>
    %43 = arith.mulf %41, %42 : vector<1x4x1xf32>
    %44 = arith.addf %39, %43 : vector<1x4x1xf32>
    %45 = arith.mulf %36, %7 : vector<1x4x1xf32>
    %46 = arith.mulf %45, %18 : vector<1x4x1xf32>
    %cst_25 = arith.constant 1.000000e+00 : f32
    %47 = vector.broadcast %cst_25 : f32 to vector<1x4x1xf32>
    %48 = arith.subf %47, %36 : vector<1x4x1xf32>
    %49 = vector.broadcast %24 : vector<1x1x1xf32> to vector<1x4x1xf32>
    %50 = arith.mulf %48, %49 : vector<1x4x1xf32>
    %51 = vector.broadcast %35 : vector<1x1x1xf32> to vector<1x4x1xf32>
    %52 = arith.mulf %50, %51 : vector<1x4x1xf32>
    %53 = arith.addf %46, %52 : vector<1x4x1xf32>
    %54 = arith.mulf %37, %44 : vector<1x4x1xf32>
    %55 = arith.mulf %37, %53 : vector<1x4x1xf32>
    %56 = arith.subf %38, %55 : vector<1x4x1xf32>
    %57 = vector.broadcast %54 : vector<1x4x1xf32> to vector<1x4x256xf32>
    %58 = arith.mulf %0, %57 : vector<1x4x256xf32>
    %59 = vector.broadcast %56 : vector<1x4x1xf32> to vector<1x4x256xf32>
    %60 = arith.addf %58, %59 : vector<1x4x256xf32>
    %c0_26 = arith.constant 0 : index
    %c0_27 = arith.constant 0 : index
    %c0_28 = arith.constant 0 : index
    %61 = vector.load %arg5[%c0_26, %c0_27, %c0_28] : memref<1x4x256xf32, #tpu.memory_space<vmem>>, vector<1x4x256xf32>
    tpu.vector_store %arg5[%c0_26, %c0_27, %c0_28], %60 {strides = array<i32>} : memref<1x4x256xf32, #tpu.memory_space<vmem>>, vector<1x4x256xf32>,
    return
  }
  func.func @transform_0(%arg0: i32) -> (i32, i32, i32) {
    %c0_i32 = arith.constant 0 : i32
    %c0_i32_0 = arith.constant 0 : i32
    %c0_i32_1 = arith.constant 0 : i32
    return %arg0, %c0_i32, %c0_i32_0 : i32, i32, i32
  }
  func.func @transform_1(%arg0: i32) -> (i32, i32, i32) {
    %c0_i32 = arith.constant 0 : i32
    %c0_i32_0 = arith.constant 0 : i32
    %c0_i32_1 = arith.constant 0 : i32
    return %arg0, %c0_i32, %c0_i32_0 : i32, i32, i32
  }
  func.func @transform_2(%arg0: i32) -> (i32, i32, i32) {
    %c0_i32 = arith.constant 0 : i32
    %c0_i32_0 = arith.constant 0 : i32
    %c0_i32_1 = arith.constant 0 : i32
    return %arg0, %c0_i32, %c0_i32_0 : i32, i32, i32
  }
  func.func @transform_3(%arg0: i32) -> (i32, i32, i32) {
    %c0_i32 = arith.constant 0 : i32
    %c0_i32_0 = arith.constant 0 : i32
    %c0_i32_1 = arith.constant 0 : i32
    %c0_i32_2 = arith.constant 0 : i32
    return %c0_i32, %c0_i32_0, %c0_i32_1 : i32, i32, i32
  }
  func.func @transform_4(%arg0: i32) -> (i32, i32, i32) {
    %c0_i32 = arith.constant 0 : i32
    %c0_i32_0 = arith.constant 0 : i32
    %c0_i32_1 = arith.constant 0 : i32
    return %arg0, %c0_i32, %c0_i32_0 : i32, i32, i32
  }
}

</mosaic_0001>

<llo_original>
// kernel: tpu_custom_call.1
$region0: #{tpu_custom_call.1}
  #allocation0 [shape = 'u32[]', space=smem, size = 0x4, offset = 0x4, fixed_abs, tag = 'smem constant byte address 0x4 - core index']
  #allocation1 [shape = 'u32[72,128]{1,0:T(1,128)}', space=vmem, size = 0x9000, scoped, tag = 'internal scratch']
  %s0 = inlined_call_operand.vmem [shape: f32[2,4,256], index: 0, kind: input, shape index: {}]
  %s1 = inlined_call_operand.vmem [shape: f32[2,4,1], index: 1, kind: input, shape index: {}]
  %s2 = inlined_call_operand.vmem [shape: f32[2,4,1], index: 2, kind: input, shape index: {}]
  %s3 = inlined_call_operand.vmem [shape: f32[1,4,1], index: 3, kind: input, shape index: {}]
  %s4 = inlined_call_operand.hbm [shape: f32[2,4,256], index: 4, kind: output, shape index: {}]
  %s5 = sld [smem:[#allocation0]]
  $region49: #{tpu_custom_call.1} parent=0
    _
  %s7 = ssub.s32 1, %s5
  %s8 = scalar_select 0, %s7, %s5
  $region1: #{tpu_custom_call.1} parent=0
    #allocation2 [shape = 'u8[8192]{0}', space=vmem, size = 0x2000, scoped, tag = 'output window, operand 0']
    #allocation3 [shape = 's32[2]{0}', space=sflag, size = 0x8, scoped, tag = 'scoped memory for tpu_custom_call.1']
    %9 = vsyncpa [#allocation3], 0
    %s10 = scalar_lea.sflag [#allocation3], 1
    %11 = vsyncpa %s10, 0
    loop: start=0, step=1, limit=4
    $region2: #{tpu_custom_call.1} parent=1 // loop_pre_header
      _
    $region3: #{tpu_custom_call.1} parent=1 // loop_header
      %s13 = sphi 0, %s17
      %p14 = scmp.ge.s32.totalorder %s13, 4
      %s23 = sphi 0, %s25
      %s26 = sphi 0, %s23
      %s27 = sphi 0, %s26
      %s43 = sphi 0, %s27
      %s49 = sphi 0, %s51
      %s52 = sphi 0, %s49
      %s53 = sphi 0, %s52
      %s69 = sphi 0, %s53
      %s75 = sphi 0, %s77
      %s78 = sphi 0, %s75
      %s79 = sphi 0, %s78
      %s95 = sphi 0, %s79
      %s99 = sphi 0, %s99
      %s101 = sphi 0, %s99
      %s102 = sphi 0, %s101
      %s116 = sphi 0, %s102
      %s122 = sphi 0, %s124
      %s125 = sphi 0, %s122
      %s126 = sphi 0, %s125
      %s142 = sphi 0, %s126
    $region4: #{tpu_custom_call.1} parent=1 // loop_header_branch
      %16 = sbr.rel (%p14) target = $region8
    $region5: #{tpu_custom_call.1} parent=1 // loop_body
      %s18 = ssub.s32 %s13, 1
      %s19 = ssub.s32 %s13, 2
      %s20 = sadd.s32 %s13, 1
      %s21 = ssub.s32 %s13, %s20
      %p22 = scmp.eq.s32.totalorder %s21, 0
      %s24 = sadd.s32 %s23, 1
      %s25 = scalar_select %p22, %s23, %s24
      %p28 = pneg %p22
      %p29 = scmp.eq.s32.totalorder %s13, 1
      %p30 = por %p28, %p29
      %p31 = scmp.ne.s32.totalorder %s23, %s26
      %p32 = scmp.eq.s32.totalorder %s13, 0
      %p33 = por %p31, %p32
      %p34 = scmp.ne.s32.totalorder %s23, %s26
      %p35 = scmp.eq.s32.totalorder %s18, 1
      %p36 = por %p34, %p35
      %p37 = scmp.ne.s32.totalorder %s26, %s27
      %p38 = scmp.eq.s32.totalorder %s18, 0
      %p39 = por %p37, %p38
      %p40 = scmp.ne.s32.totalorder %s26, %s27
      %p41 = scmp.eq.s32.totalorder %s19, 1
      %p42 = por %p40, %p41
      %p44 = scmp.ne.s32.totalorder %s27, %s43
      %p45 = scmp.eq.s32.totalorder %s19, 0
      %p46 = por %p44, %p45
      %s47 = ssub.s32 %s13, %s20
      %p48 = scmp.eq.s32.totalorder %s47, 0
      %s50 = sadd.s32 %s49, 1
      %s51 = scalar_select %p48, %s49, %s50
      %p54 = pneg %p48
      %p55 = scmp.eq.s32.totalorder %s13, 1
      %p56 = por %p54, %p55
      %p57 = scmp.ne.s32.totalorder %s49, %s52
      %p58 = scmp.eq.s32.totalorder %s13, 0
      %p59 = por %p57, %p58
      %p60 = scmp.ne.s32.totalorder %s49, %s52
      %p61 = scmp.eq.s32.totalorder %s18, 1
      %p62 = por %p60, %p61
      %p63 = scmp.ne.s32.totalorder %s52, %s53
      %p64 = scmp.eq.s32.totalorder %s18, 0
      %p65 = por %p63, %p64
      %p66 = scmp.ne.s32.totalorder %s52, %s53
      %p67 = scmp.eq.s32.totalorder %s19, 1
      %p68 = por %p66, %p67
      %p70 = scmp.ne.s32.totalorder %s53, %s69
      %p71 = scmp.eq.s32.totalorder %s19, 0
      %p72 = por %p70, %p71
      %s73 = ssub.s32 %s13, %s20
      %p74 = scmp.eq.s32.totalorder %s73, 0
      %s76 = sadd.s32 %s75, 1
      %s77 = scalar_select %p74, %s75, %s76
      %p80 = pneg %p74
      %p81 = scmp.eq.s32.totalorder %s13, 1
      %p82 = por %p80, %p81
      %p83 = scmp.ne.s32.totalorder %s75, %s78
      %p84 = scmp.eq.s32.totalorder %s13, 0
      %p85 = por %p83, %p84
      %p86 = scmp.ne.s32.totalorder %s75, %s78
      %p87 = scmp.eq.s32.totalorder %s18, 1
      %p88 = por %p86, %p87
      %p89 = scmp.ne.s32.totalorder %s78, %s79
      %p90 = scmp.eq.s32.totalorder %s18, 0
      %p91 = por %p89, %p90
      %p92 = scmp.ne.s32.totalorder %s78, %s79
      %p93 = scmp.eq.s32.totalorder %s19, 1
      %p94 = por %p92, %p93
      %p96 = scmp.ne.s32.totalorder %s79, %s95
      %p97 = scmp.eq.s32.totalorder %s19, 0
      %p98 = por %p96, %p97
      %s100 = sadd.s32 %s99, 1
      %p103 = scmp.eq.s32.totalorder %s13, 1
      %p104 = scmp.ne.s32.totalorder %s99, %s101
      %p105 = scmp.eq.s32.totalorder %s13, 0
      %p106 = por %p104, %p105
      %p107 = scmp.ne.s32.totalorder %s99, %s101
      %p108 = scmp.eq.s32.totalorder %s18, 1
      %p109 = por %p107, %p108
      %p110 = scmp.ne.s32.totalorder %s101, %s102
      %p111 = scmp.eq.s32.totalorder %s18, 0
      %p112 = por %p110, %p111
      %p113 = scmp.ne.s32.totalorder %s101, %s102
      %p114 = scmp.eq.s32.totalorder %s19, 1
      %p115 = por %p113, %p114
      %p117 = scmp.ne.s32.totalorder %s102, %s116
      %p118 = scmp.eq.s32.totalorder %s19, 0
      %p119 = por %p117, %p118
      %s120 = ssub.s32 %s13, %s20
      %p121 = scmp.eq.s32.totalorder %s120, 0
      %s123 = sadd.s32 %s122, 1
      %s124 = scalar_select %p121, %s122, %s123
      %p127 = pneg %p121
      %p128 = scmp.eq.s32.totalorder %s13, 1
      %p129 = por %p127, %p128
      %p130 = scmp.ne.s32.totalorder %s122, %s125
      %p131 = scmp.eq.s32.totalorder %s13, 0
      %p132 = por %p130, %p131
      %p133 = scmp.ne.s32.totalorder %s122, %s125
      %p134 = scmp.eq.s32.totalorder %s18, 1
      %p135 = por %p133, %p134
      %p136 = scmp.ne.s32.totalorder %s125, %s126
      %p137 = scmp.eq.s32.totalorder %s18, 0
      %p138 = por %p136, %p137
      %p139 = scmp.ne.s32.totalorder %s125, %s126
      %p140 = scmp.eq.s32.totalorder %s19, 1
      %p141 = por %p139, %p140
      %p143 = scmp.ne.s32.totalorder %s126, %s142
      %p144 = scmp.eq.s32.totalorder %s19, 0
      %p145 = por %p143, %p144
      %p146 = scmp.le.s32.totalorder 1, %s13
      %p147 = scmp.lt.s32.totalorder %s13, 3
      %p148 = pnand %p146, %p147
      %p149 = pneg %p148
      // Predicated region
      $region9: #{tpu_custom_call.1} parent=5 // pred_check
        _
      $region10: #{tpu_custom_call.1} parent=5 // pred_check_branch
        %151 = sbr.rel (%p148) target = $region12
      $region11: #{tpu_custom_call.1} parent=5 // pred_region
        %s152 = ssub.s32 %s13, 1
        // Predicated region
        $region13: #{tpu_custom_call.1} parent=11 // pred_check
          %p153 = pneg %p112
        $region14: #{tpu_custom_call.1} parent=11 // pred_check_branch
          %155 = sbr.rel (%p153) target = $region16
        $region15: #{tpu_custom_call.1} parent=11 // pred_region
          _
        $region16: #{tpu_custom_call.1} parent=11 // pred_fallthru
          _
      $region12: #{tpu_custom_call.1} parent=5 // pred_fallthru
        _
      %p156 = scmp.lt.s32.totalorder %s13, 2
      // Predicated region
      $region17: #{tpu_custom_call.1} parent=5 // pred_check
        %p157 = pneg %p156
      $region18: #{tpu_custom_call.1} parent=5 // pred_check_branch
        %159 = sbr.rel (%p157) target = $region20
      $region19: #{tpu_custom_call.1} parent=5 // pred_region
        // Predicated region
        $region21: #{tpu_custom_call.1} parent=19 // pred_check
          %p160 = pneg %p33
        $region22: #{tpu_custom_call.1} parent=19 // pred_check_branch
          %162 = sbr.rel (%p160) target = $region24
        $region23: #{tpu_custom_call.1} parent=19 // pred_region
          %p163 = scmp.lt.s32.totalorder %s13, 1
          %s164 = scalar_select %p163, %s13, 1
          %s165 = smul.addr %s164, 2
          %s166 = smul.addr %s165, 4
          %s167 = scalar_lea.vmem %s0, %s166
        $region24: #{tpu_custom_call.1} parent=19 // pred_fallthru
          _
        // Predicated region
        $region25: #{tpu_custom_call.1} parent=19 // pred_check
          %p168 = pneg %p59
        $region26: #{tpu_custom_call.1} parent=19 // pred_check_branch
          %170 = sbr.rel (%p168) target = $region28
        $region27: #{tpu_custom_call.1} parent=19 // pred_region
          %p171 = scmp.lt.s32.totalorder %s13, 1
          %s172 = scalar_select %p171, %s13, 1
          %s173 = smul.addr %s172, 4
          %s174 = scalar_lea.vmem %s1, %s173
        $region28: #{tpu_custom_call.1} parent=19 // pred_fallthru
          _
        // Predicated region
        $region29: #{tpu_custom_call.1} parent=19 // pred_check
          %p175 = pneg %p85
        $region30: #{tpu_custom_call.1} parent=19 // pred_check_branch
          %177 = sbr.rel (%p175) target = $region32
        $region31: #{tpu_custom_call.1} parent=19 // pred_region
          %p178 = scmp.lt.s32.totalorder %s13, 1
          %s179 = scalar_select %p178, %s13, 1
          %s180 = smul.addr %s179, 4
          %s181 = scalar_lea.vmem %s2, %s180
        $region32: #{tpu_custom_call.1} parent=19 // pred_fallthru
          _
      $region20: #{tpu_custom_call.1} parent=5 // pred_fallthru
        _
      %p182 = scmp.le.s32.totalorder 1, %s13
      %p183 = scmp.lt.s32.totalorder %s13, 3
      %p184 = pnand %p182, %p183
      %p185 = pneg %p184
      // Predicated region
      $region33: #{tpu_custom_call.1} parent=5 // pred_check
        _
      $region34: #{tpu_custom_call.1} parent=5 // pred_check_branch
        %187 = sbr.rel (%p184) target = $region36
      $region35: #{tpu_custom_call.1} parent=5 // pred_region
        %s188 = ssub.s32 %s13, 1
        %p189 = scmp.lt.s32.totalorder %s18, 1
        %s190 = scalar_select %p189, %s18, 1
        %s191 = smul.addr %s190, 2
        %s192 = smul.addr %s191, 4
        %s193 = scalar_lea.vmem %s0, %s192
        %p194 = pneg %p39
        %p195 = pneg %p36
        %p196 = scmp.lt.s32.totalorder %s18, 1
        %s197 = scalar_select %p196, %s18, 1
        %s198 = smul.addr %s197, 4
        %s199 = scalar_lea.vmem %s1, %s198
        %p200 = pneg %p65
        %p201 = pneg %p62
        %p202 = scmp.lt.s32.totalorder %s18, 1
        %s203 = scalar_select %p202, %s18, 1
        %s204 = smul.addr %s203, 4
        %s205 = scalar_lea.vmem %s2, %s204
        %p206 = pneg %p91
        %p207 = pneg %p88
        %p208 = pneg %p112
        %p209 = pneg %p109
        %p210 = pneg %p138
        %p211 = pneg %p135
        %s212 = sand.u32 %s125, 1
        %s213 = scalar_lea.sflag [#allocation3], %s212
        %s214 = sand.u32 %s125, 1
        %s215 = smul.addr %s214, 8
        %s216 = scalar_lea.vmem [#allocation2], %s215
        %p217 = scmp.lt.s32.totalorder %s18, 1
        %s218 = scalar_select %p217, %s18, 1
        %s219 = smul.addr %s218, 2
        %s220 = smul.addr %s219, 4
        %s221 = scalar_lea.vmem %s0, %s220
        %p222 = scmp.lt.s32.totalorder %s18, 1
        %s223 = scalar_select %p222, %s18, 1
        %s224 = smul.addr %s223, 4
        %s225 = scalar_lea.vmem %s1, %s224
        %p226 = scmp.lt.s32.totalorder %s18, 1
        %s227 = scalar_select %p226, %s18, 1
        %s228 = smul.addr %s227, 4
        %s229 = scalar_lea.vmem %s2, %s228
        %v230 = vld [vmem:[%s221] sm:$0xff]
        %232 = vst [vmem:[#allocation1] ss:$2 sm:$0xff] %v230
        %v233 = vld.sshfl [vmem:[#allocation1] sm:$0xff pattern:$0x75316420]
        %v234 = vld.sshfl [vmem:[#allocation1 + $0x8] sm:$0xff pattern:$0x75316420]
        %vm237 = vcmask 1043456
        %v238 = vsel %vm237, %v233, 0.0
        %v239 = vsel %vm237, %v234, 0.0
        %v240 = vadd.f32 %v238, %v239
        %241 = vadd.xlane.f32.xlu0 %v240
        %v242 = vpop.xlane.xlu0 %241
        %v243 = vmul.f32 %v230, %v230
        %245 = vst [vmem:[#allocation1] ss:$2 sm:$0xff] %v243
        %v246 = vld.sshfl [vmem:[#allocation1] sm:$0xff pattern:$0x75316420]
        %v247 = vld.sshfl [vmem:[#allocation1 + $0x8] sm:$0xff pattern:$0x75316420]
        %v250 = vsel %vm237, %v246, 0.0
        %v251 = vsel %vm237, %v247, 0.0
        %v252 = vadd.f32 %v250, %v251
        %253 = vadd.xlane.f32.xlu0 %v252
        %v254 = vpop.xlane.xlu0 %253
        %v255 = vrcp.pop 256.0
        %v256 = vmul.f32 256.0, %v255
        %v257 = vsub.f32 1.0, %v256
        %v258 = vmul.f32 %v255, %v257
        %v259 = vadd.f32 %v255, %v258
        %vm260 = vweird.f32 %v255
        %v261 = vsel %vm260, %v255, %v259
        %v262 = vmul.f32 %v242, %v261
        %v263 = vmul.f32 %v262, 256.0
        %v264 = vmul.f32 %v263, %v262
        %v265 = vsub.f32 %v254, %v264
        %v266 = vrcp.pop 255.0
        %v267 = vmul.f32 255.0, %v266
        %v268 = vsub.f32 1.0, %v267
        %v269 = vmul.f32 %v266, %v268
        %v270 = vadd.f32 %v266, %v269
        %vm271 = vweird.f32 %v266
        %v272 = vsel %vm271, %v266, %v270
        %v273 = vmul.f32 %v265, %v272
        %v274 = vmax.f32 %v273, 0.0
        %v275 = vadd.f32 %v274, 1e-05
        %v276 = vrsqrt.pop %v275
        %v277 = vmul.f32 %v276, %v275
        %v278 = vmul.f32 %v277, %v276
        %v279 = vmul.f32 0.5, %v278
        %v280 = vsub.f32 1.5, %v279
        %v281 = vmul.f32 %v276, %v280
        %vm282 = vweird.f32 %v275
        %vm283 = vweird.f32 %v276
        %vm284 = vmor %vm282, %vm283
        %v285 = vsel %vm284, %v276, %v281
        %v286 = vsel %vm237, %v242, 0.0
        %v287 = vrot.slane %v286, 4
        %v288 = vadd.f32 %v286, %v287
        %v289 = vrot.slane %v288, 2
        %v290 = vadd.f32 %v288, %v289
        %v291 = vrot.slane %v290, 1
        %v292 = vadd.f32 %v290, %v291
        %v293 = vsel %vm237, %v254, 0.0
        %v294 = vrot.slane %v293, 4
        %v295 = vadd.f32 %v293, %v294
        %v296 = vrot.slane %v295, 2
        %v297 = vadd.f32 %v295, %v296
        %v298 = vrot.slane %v297, 1
        %v299 = vadd.f32 %v297, %v298
        %v300 = vrcp.pop 1024.0
        %v301 = vmul.f32 1024.0, %v300
        %v302 = vsub.f32 1.0, %v301
        %v303 = vmul.f32 %v300, %v302
        %v304 = vadd.f32 %v300, %v303
        %vm305 = vweird.f32 %v300
        %v306 = vsel %vm305, %v300, %v304
        %v307 = vmul.f32 %v292, %v306
        %v308 = vmul.f32 %v307, 1024.0
        %v309 = vmul.f32 %v308, %v307
        %v310 = vsub.f32 %v299, %v309
        %v311 = vrcp.pop 1023.0
        %v312 = vmul.f32 1023.0, %v311
        %v313 = vsub.f32 1.0, %v312
        %v314 = vmul.f32 %v311, %v313
        %v315 = vadd.f32 %v311, %v314
        %vm316 = vweird.f32 %v311
        %v317 = vsel %vm316, %v311, %v315
        %v318 = vmul.f32 %v310, %v317
        %v319 = vmax.f32 %v318, 0.0
        %v320 = vadd.f32 %v319, 1e-05
        %v321 = vrsqrt.pop %v320
        %v322 = vmul.f32 %v321, %v320
        %v323 = vmul.f32 %v322, %v321
        %v324 = vmul.f32 0.5, %v323
        %v325 = vsub.f32 1.5, %v324
        %v326 = vmul.f32 %v321, %v325
        %vm327 = vweird.f32 %v320
        %vm328 = vweird.f32 %v321
        %vm329 = vmor %vm327, %vm328
        %v330 = vsel %vm329, %v321, %v326
        %v331 = vld [vmem:[%s3] sm:$0xf]
        %v332 = vld [vmem:[%s225] sm:$0xf]
        %v333 = vld [vmem:[%s229] sm:$0xf]
        %v334 = vmul.f32 %v331, %v285
        %v335 = vsub.f32 1.0, %v331
        %v336 = vmul.f32 %v335, %v330
        %v337 = vadd.f32 %v334, %v336
        %v338 = vmul.f32 %v331, %v262
        %v339 = vmul.f32 %v338, %v285
        %v340 = vmul.f32 %v335, %v307
        %v341 = vmul.f32 %v340, %v330
        %v342 = vadd.f32 %v339, %v341
        %v343 = vmul.f32 %v332, %v337
        %v344 = vmul.f32 %v332, %v342
        %v345 = vsub.f32 %v333, %v344
        %347 = vset.pattern.permute.xlu0 0
        %348 = vperm.xlu0 %347, %v343
        %v349 = vpop.permute.xlu0 %348
        %v351 = vunpack.c.l.s4 839922192
        %v352 = vunpack.c.0.s8 %v351
        %v353 = vperm.slane %v349, %v352
        %v355 = vmul.f32 %v230, %v353
        %357 = vset.pattern.permute.xlu0 0
        %358 = vperm.xlu0 %357, %v345
        %v359 = vpop.permute.xlu0 %358
        %v361 = vunpack.c.l.s4 839922192
        %v362 = vunpack.c.0.s8 %v361
        %v363 = vperm.slane %v359, %v362
        %v365 = vadd.f32 %v355, %v363
        %366 = vst [vmem:[%s216] sm:$0xff] %v365
        %s367 = sand.u32 %s125, 1
        %s368 = scalar_lea.sflag [#allocation3], %s367
        %s369 = sand.u32 %s125, 1
        %s370 = smul.addr %s369, 8
        %s371 = scalar_lea.vmem [#allocation2], %s370
        // Predicated region
        $region37: #{tpu_custom_call.1} parent=35 // pred_check
          %p372 = pneg %p135
        $region38: #{tpu_custom_call.1} parent=35 // pred_check_branch
          %374 = sbr.rel (%p372) target = $region40
        $region39: #{tpu_custom_call.1} parent=35 // pred_region
          %376 = vsyncadd %s368, 0
          %s377 = smul.addr %s18, 2
          %s378 = smul.addr %s377, 4
          %s379 = scalar_lea.hbm %s4, %s378
          %s381 = sshll.u32 %s371, 4
          %s382 = int_to_ptr.vmem [resolvable:$true] %s381
          %s383 = sshll.u32 %s379, 4
          %s384 = int_to_ptr.hbm [resolvable:$true] %s383
          %386 = dma.vmem_to_hbm [thread:$0]  %s382, 128, %s384, %s368
        $region40: #{tpu_custom_call.1} parent=35 // pred_fallthru
          _
      $region36: #{tpu_custom_call.1} parent=5 // pred_fallthru
        _
      %p387 = scmp.le.s32.totalorder 2, %s13
      // Predicated region
      $region41: #{tpu_custom_call.1} parent=5 // pred_check
        %p388 = pneg %p387
      $region42: #{tpu_custom_call.1} parent=5 // pred_check_branch
        %390 = sbr.rel (%p388) target = $region44
      $region43: #{tpu_custom_call.1} parent=5 // pred_region
        %s391 = ssub.s32 %s13, 2
        // Predicated region
        $region45: #{tpu_custom_call.1} parent=43 // pred_check
          %p392 = pneg %p141
        $region46: #{tpu_custom_call.1} parent=43 // pred_check_branch
          %394 = sbr.rel (%p392) target = $region48
        $region47: #{tpu_custom_call.1} parent=43 // pred_region
          %s395 = sand.u32 %s126, 1
          %s396 = scalar_lea.sflag [#allocation3], %s395
          %s397 = sand.u32 %s126, 1
          %s398 = smul.addr %s397, 8
          %s399 = scalar_lea.vmem [#allocation2], %s398
          %401 = dma.done %s396, 128
        $region48: #{tpu_custom_call.1} parent=43 // pred_fallthru
          _
      $region44: #{tpu_custom_call.1} parent=5 // pred_fallthru
        _
    $region6: #{tpu_custom_call.1} parent=1 // loop_footer
      %s17 = sadd.s32 1, %s13
    $region7: #{tpu_custom_call.1} parent=1 // loop_footer_branch
      %12 = sbr.rel target = $region3
    $region8: #{tpu_custom_call.1} parent=1 // loop_exit
      _
    %402 = vsyncpa [#allocation3], 1
    %s403 = scalar_lea.sflag [#allocation3], 1
    %404 = vsyncpa %s403, 1

</llo_original>
